<compile_context>
chip_gen: v5e
topology: v5e:2x2
jax: 0.10.0
libtpu: 0.0.40
codegen_flags: <defaults>
</compile_context>

<pallas_src>
import jax
import jax.numpy as jnp
from jax import lax
from jax.experimental import pallas as pl
from jax.experimental.pallas import tpu as pltpu


def gru_net_kernel(x_ref, wih_ref, whh_ref, bias_ref, wfc_ref, wout_ref,
                   logp_ref, hid_ref):
    """Full forward pass.

    x_ref    : (B*T, I)  batch-major input rows (natural contiguous view of x)
    wih_ref  : (I, 3H)   input weights, gates [r | z | n] along lanes
    whh_ref  : (H, 3H)   hidden weights, gates [r | z | n] along lanes
    bias_ref : (4, Wb)   row0 = folded gi bias (b_i{r,z}+b_h{r,z} | b_in),
                         row1 = b_hn, row2 = b_fc, row3 = b_out (lane-padded)
    wfc_ref  : (H, H)    fc weight (transposed)
    wout_ref : (H, O)    out weight (transposed)
    logp_ref : (B*T, O)  log-softmax outputs, batch-major rows (PyTorch order)
    hid_ref  : (B, H)    final hidden state
    """
    B, H = hid_ref.shape
    BT, O = logp_ref.shape
    T_ = BT // B
    H3 = 3 * H

    bias = bias_ref[...]                                   # one padded tile
    b_gi = bias[0:1, 0:H3]                                 # folded r/z + b_in
    b_hn = jnp.broadcast_to(bias[1:2, 0:H], (B, H))        # broadcast hoisted
    b_fc = bias[2:3, 0:H]
    b_out = bias[3:4, 0:O]

    # ---- Hoisted input projection: ONE fused GEMM over all B*T rows. ----
    gi = jnp.dot(x_ref[...], wih_ref[...],
                 preferred_element_type=jnp.float32) + b_gi          # (B*T, 3H)
    # Per-batch contiguous slabs (static, tile-aligned value slices).
    gi_slabs = [gi[b * T_:(b + 1) * T_, :] for b in range(B)]        # each (T, 3H)

    whh = whh_ref[...]                                     # resident for the loop

    h = jnp.zeros((B, H), jnp.float32)
    hs = []                                                # per-step hidden values
    # T is small -> statically unrolled; the gi row gathers are static value
    # slices with no dependence on h, so the scheduler hoists them off the
    # serial h->h chain.  Only one MXU dot remains per step.
    for t in range(T_):
        gi_t = jnp.concatenate([s[t:t + 1, :] for s in gi_slabs], axis=0)  # (B, 3H)
        gh = jnp.dot(h, whh, preferred_element_type=jnp.float32)           # (B, 3H)
        rz = jax.nn.sigmoid(gi_t[:, :2 * H] + gh[:, :2 * H])
        r = rz[:, :H]
        z = rz[:, H:]
        n = jnp.tanh(gi_t[:, 2 * H:] + r * (gh[:, 2 * H:] + b_hn))
        h = (1.0 - z) * n + z * h
        hs.append(h)

    hid_ref[...] = h

    # ---- Batched epilogue: fc(ReLU) + out + log-softmax over all B*T rows,
    #      assembled batch-major so the final store is one contiguous slab in
    #      PyTorch's out.view(-1, H) order (no wrapper transpose needed). ----
    hs_bm = jnp.concatenate(
        [jnp.concatenate([hs[t][b:b + 1, :] for t in range(T_)], axis=0)
         for b in range(B)], axis=0)                                   # (B*T, H)
    hf = jnp.maximum(
        jnp.dot(hs_bm, wfc_ref[...], preferred_element_type=jnp.float32)
        + b_fc, 0.0)
    logits = jnp.dot(hf, wout_ref[...],
                     preferred_element_type=jnp.float32) + b_out
    m = jnp.max(logits, axis=-1, keepdims=True)
    lse = jnp.log(jnp.sum(jnp.exp(logits - m), axis=-1, keepdims=True)) + m
    logp_ref[...] = logits - lse


def network_forward(x, params):
    """x: (B, T, I) float32. Returns (logprobs (B*T, O), hidden (1, B, H))."""
    B, T_, I = x.shape
    H = params["w_hh"].shape[1]
    O = params["w_out"].shape[0]
    H3 = 3 * H

    w_ih, w_hh = params["w_ih"], params["w_hh"]            # (3H, I), (3H, H)
    b_ih, b_hh = params["b_ih"], params["b_hh"]

    # Consolidated kernel operands (6 arrays / 6 DMAs instead of 15).
    wih_cat = w_ih.T                                       # (I, 3H)
    whh_cat = w_hh.T                                       # (H, 3H)
    wfc_t = params["w_fc"].T                               # (H, H)
    wout_t = params["w_out"].T                             # (H, O)
    # TODO(synk): cast weights/x to bf16 (keep f32 accumulate) at real sizes.

    Wb = max(H3, O)
    bias = jnp.zeros((4, Wb), jnp.float32)
    bias = bias.at[0, :H3].set(
        jnp.concatenate([b_ih[:2 * H] + b_hh[:2 * H],      # fold b_ir+b_hr, b_iz+b_hz
                         b_ih[2 * H:]]))                   # b_in only
    bias = bias.at[1, :H].set(b_hh[2 * H:])                # b_hn stays inside r*(...)
    bias = bias.at[2, :H].set(params["b_fc"])
    bias = bias.at[3, :O].set(params["b_out"])

    x_rows = x.reshape(B * T_, I)                          # contiguous view, no transpose

    vmem = pl.BlockSpec(memory_space=pltpu.MemorySpace.VMEM)

    flops = 2 * T_ * B * (I * H3 + H * H3 + H * H + H * O)
    cost = pl.CostEstimate(
        flops=flops,
        transcendentals=T_ * B * (3 * H + O + 1),
        bytes_accessed=4 * (x.size + T_ * B * O + B * H + I * H3 + H * H3
                            + H * H + H * O + 4 * Wb))

    logp, h_last = pl.pallas_call(
        gru_net_kernel,
        out_shape=(jax.ShapeDtypeStruct((B * T_, O), jnp.float32),
                   jax.ShapeDtypeStruct((B, H), jnp.float32)),
        in_specs=[vmem] * 6,
        out_specs=(vmem, vmem),
        cost_estimate=cost,
    )(x_rows, wih_cat, whh_cat, bias, wfc_t, wout_t)

    # PyTorch semantics: rows already batch-major; hidden is (n_layers=1, B, H).
    return logp, h_last[None]


def init_params(key, input_size, output_size, hidden_dim):
    """Deterministic init mirroring PyTorch default U(-1/sqrt(fan), 1/sqrt(fan))."""
    ks = jax.random.split(key, 8)
    sh = 1.0 / jnp.sqrt(hidden_dim)
    u = lambda k, shape, s: jax.random.uniform(k, shape, jnp.float32, -s, s)
    return {
        "w_ih": u(ks[0], (3 * hidden_dim, input_size), sh),
        "w_hh": u(ks[1], (3 * hidden_dim, hidden_dim), sh),
        "b_ih": u(ks[2], (3 * hidden_dim,), sh),
        "b_hh": u(ks[3], (3 * hidden_dim,), sh),
        "w_fc": u(ks[4], (hidden_dim, hidden_dim), sh),
        "b_fc": u(ks[5], (hidden_dim,), sh),
        "w_out": u(ks[6], (output_size, hidden_dim), sh),
        "b_out": u(ks[7], (output_size,), sh),
    }


def reference_forward(x, params):
    """Pure-JAX reference of the same semantics (sanity check)."""
    B, T_, _ = x.shape
    H = params["w_hh"].shape[1]

    def cell(h, x_t):
        gi = x_t @ params["w_ih"].T + params["b_ih"]
        gh = h @ params["w_hh"].T + params["b_hh"]
        r = jax.nn.sigmoid(gi[:, :H] + gh[:, :H])
        z = jax.nn.sigmoid(gi[:, H:2 * H] + gh[:, H:2 * H])
        n = jnp.tanh(gi[:, 2 * H:] + r * gh[:, 2 * H:])
        h_new = (1.0 - z) * n + z * h
        return h_new, h_new

    h0 = jnp.zeros((B, H), jnp.float32)
    h_last, hs = lax.scan(cell, h0, jnp.transpose(x, (1, 0, 2)))
    out_seq = jnp.transpose(hs, (1, 0, 2)).reshape(-1, H)
    hf = jnp.maximum(out_seq @ params["w_fc"].T + params["b_fc"], 0.0)
    logits = hf @ params["w_out"].T + params["b_out"]
    logp = jax.nn.log_softmax(logits, axis=-1)
    return logp, h_last[None]


if __name__ == "__main__":
    # model = Network(input_size=len(labels), output_size=len(labels),
    #                 hidden_dim=8, n_layers=1)
    batch, seq = 2, 8
    n_labels = 10
    hidden_dim = 8

    key = jax.random.PRNGKey(0)
    kx, kp = jax.random.split(key)
    x = jax.random.normal(kx, (batch, seq, n_labels), dtype=jnp.float32)
    params = init_params(kp, n_labels, n_labels, hidden_dim)

    out, hidden = jax.jit(network_forward)(x, params)
    jax.block_until_ready((out, hidden))

    ref_out, ref_hidden = reference_forward(x, params)
    assert out.shape == (batch * seq, n_labels)
    assert hidden.shape == (1, batch, hidden_dim)
    assert jnp.allclose(out, ref_out, atol=1e-4), "logprob mismatch"
    assert jnp.allclose(hidden, ref_hidden, atol=1e-4), "hidden mismatch"

    print("KERNEL_OK")
</pallas_src>

<mosaic_0001>
module attributes {stable_mosaic.version = 11 : i64} {
  func.func @gru_net_kernel(%arg0: memref<16x10xf32, #tpu.memory_space<vmem>>, %arg1: memref<10x24xf32, #tpu.memory_space<vmem>>, %arg2: memref<8x24xf32, #tpu.memory_space<vmem>>, %arg3: memref<4x24xf32, #tpu.memory_space<vmem>>, %arg4: memref<8x8xf32, #tpu.memory_space<vmem>>, %arg5: memref<8x10xf32, #tpu.memory_space<vmem>>, %arg6: memref<16x10xf32, #tpu.memory_space<vmem>>, %arg7: memref<2x8xf32, #tpu.memory_space<vmem>>) attributes {dimension_semantics = [], scalar_prefetch = 0 : i64, scratch_operands = 0 : i64, tpu.core_type = #tpu.core_type<tc>} {
    %c0 = arith.constant 0 : index
    %c0_0 = arith.constant 0 : index
    %0 = vector.load %arg3[%c0, %c0_0] : memref<4x24xf32, #tpu.memory_space<vmem>>, vector<4x24xf32>
    %1 = vector.extract_strided_slice %0 {offsets = [0, 0], sizes = [1, 24], strides = [1, 1]} : vector<4x24xf32> to vector<1x24xf32>
    %2 = vector.extract_strided_slice %0 {offsets = [1, 0], sizes = [1, 8], strides = [1, 1]} : vector<4x24xf32> to vector<1x8xf32>
    %3 = vector.shape_cast %2 : vector<1x8xf32> to vector<1x8xf32>
    %4 = vector.broadcast %3 : vector<1x8xf32> to vector<2x8xf32>
    %5 = vector.extract_strided_slice %0 {offsets = [2, 0], sizes = [1, 8], strides = [1, 1]} : vector<4x24xf32> to vector<1x8xf32>
    %6 = vector.extract_strided_slice %0 {offsets = [3, 0], sizes = [1, 10], strides = [1, 1]} : vector<4x24xf32> to vector<1x10xf32>
    %c0_1 = arith.constant 0 : index
    %c0_2 = arith.constant 0 : index
    %7 = vector.load %arg0[%c0_1, %c0_2] : memref<16x10xf32, #tpu.memory_space<vmem>>, vector<16x10xf32>
    %c0_3 = arith.constant 0 : index
    %c0_4 = arith.constant 0 : index
    %8 = vector.load %arg1[%c0_3, %c0_4] : memref<10x24xf32, #tpu.memory_space<vmem>>, vector<10x24xf32>
    %cst = arith.constant dense<0.000000e+00> : vector<16x24xf32>
    %9 = tpu.matmul %7, %8, %cst {dimension_numbers = #tpu.dot_dimension_numbers<[1], [0], [0], [1], [0, 0, 1, 1], [], []>} : vector<16x10xf32>, vector<10x24xf32>, vector<16x24xf32> -> vector<16x24xf32>
    %10 = vector.broadcast %1 : vector<1x24xf32> to vector<16x24xf32>
    %11 = arith.addf %9, %10 : vector<16x24xf32>
    %12 = vector.extract_strided_slice %11 {offsets = [0, 0], sizes = [8, 24], strides = [1, 1]} : vector<16x24xf32> to vector<8x24xf32>
    %13 = vector.extract_strided_slice %11 {offsets = [8, 0], sizes = [8, 24], strides = [1, 1]} : vector<16x24xf32> to vector<8x24xf32>
    %c0_5 = arith.constant 0 : index
    %c0_6 = arith.constant 0 : index
    %14 = vector.load %arg2[%c0_5, %c0_6] : memref<8x24xf32, #tpu.memory_space<vmem>>, vector<8x24xf32>
    %cst_7 = arith.constant 0.000000e+00 : f32
    %15 = vector.broadcast %cst_7 : f32 to vector<2x8xf32>
    %16 = vector.extract_strided_slice %12 {offsets = [0, 0], sizes = [1, 24], strides = [1, 1]} : vector<8x24xf32> to vector<1x24xf32>
    %17 = vector.extract_strided_slice %13 {offsets = [0, 0], sizes = [1, 24], strides = [1, 1]} : vector<8x24xf32> to vector<1x24xf32>
    %18 = tpu.concatenate %16, %17 in 0 : vector<1x24xf32>, vector<1x24xf32> -> vector<2x24xf32>
    %cst_8 = arith.constant dense<0.000000e+00> : vector<2x24xf32>
    %19 = tpu.matmul %15, %14, %cst_8 {dimension_numbers = #tpu.dot_dimension_numbers<[1], [0], [0], [1], [0, 0, 1, 1], [], []>} : vector<2x8xf32>, vector<8x24xf32>, vector<2x24xf32> -> vector<2x24xf32>
    %20 = vector.extract_strided_slice %18 {offsets = [0, 0], sizes = [2, 16], strides = [1, 1]} : vector<2x24xf32> to vector<2x16xf32>
    %21 = vector.extract_strided_slice %19 {offsets = [0, 0], sizes = [2, 16], strides = [1, 1]} : vector<2x24xf32> to vector<2x16xf32>
    %22 = arith.addf %20, %21 : vector<2x16xf32>
    %23 = arith.negf %22 : vector<2x16xf32>
    %24 = math.exp %23 : vector<2x16xf32>
    %cst_9 = arith.constant 1.000000e+00 : f32
    %25 = vector.broadcast %cst_9 : f32 to vector<2x16xf32>
    %26 = arith.addf %25, %24 : vector<2x16xf32>
    %27 = arith.divf %25, %26 : vector<2x16xf32>
    %28 = vector.extract_strided_slice %27 {offsets = [0, 0], sizes = [2, 8], strides = [1, 1]} : vector<2x16xf32> to vector<2x8xf32>
    %29 = vector.extract_strided_slice %27 {offsets = [0, 8], sizes = [2, 8], strides = [1, 1]} : vector<2x16xf32> to vector<2x8xf32>
    %30 = vector.extract_strided_slice %18 {offsets = [0, 16], sizes = [2, 8], strides = [1, 1]} : vector<2x24xf32> to vector<2x8xf32>
    %31 = vector.extract_strided_slice %19 {offsets = [0, 16], sizes = [2, 8], strides = [1, 1]} : vector<2x24xf32> to vector<2x8xf32>
    %32 = arith.addf %31, %4 : vector<2x8xf32>
    %33 = arith.mulf %28, %32 : vector<2x8xf32>
    %34 = arith.addf %30, %33 : vector<2x8xf32>
    %35 = math.tanh %34 : vector<2x8xf32>
    %cst_10 = arith.constant 1.000000e+00 : f32
    %36 = vector.broadcast %cst_10 : f32 to vector<2x8xf32>
    %37 = arith.subf %36, %29 : vector<2x8xf32>
    %38 = arith.mulf %37, %35 : vector<2x8xf32>
    %39 = arith.mulf %29, %15 : vector<2x8xf32>
    %40 = arith.addf %38, %39 : vector<2x8xf32>
    %41 = vector.extract_strided_slice %12 {offsets = [1, 0], sizes = [1, 24], strides = [1, 1]} : vector<8x24xf32> to vector<1x24xf32>
    %42 = vector.extract_strided_slice %13 {offsets = [1, 0], sizes = [1, 24], strides = [1, 1]} : vector<8x24xf32> to vector<1x24xf32>
    %43 = tpu.concatenate %41, %42 in 0 : vector<1x24xf32>, vector<1x24xf32> -> vector<2x24xf32>
    %cst_11 = arith.constant dense<0.000000e+00> : vector<2x24xf32>
    %44 = tpu.matmul %40, %14, %cst_11 {dimension_numbers = #tpu.dot_dimension_numbers<[1], [0], [0], [1], [0, 0, 1, 1], [], []>} : vector<2x8xf32>, vector<8x24xf32>, vector<2x24xf32> -> vector<2x24xf32>
    %45 = vector.extract_strided_slice %43 {offsets = [0, 0], sizes = [2, 16], strides = [1, 1]} : vector<2x24xf32> to vector<2x16xf32>
    %46 = vector.extract_strided_slice %44 {offsets = [0, 0], sizes = [2, 16], strides = [1, 1]} : vector<2x24xf32> to vector<2x16xf32>
    %47 = arith.addf %45, %46 : vector<2x16xf32>
    %48 = arith.negf %47 : vector<2x16xf32>
    %49 = math.exp %48 : vector<2x16xf32>
    %cst_12 = arith.constant 1.000000e+00 : f32
    %50 = vector.broadcast %cst_12 : f32 to vector<2x16xf32>
    %51 = arith.addf %50, %49 : vector<2x16xf32>
    %52 = arith.divf %50, %51 : vector<2x16xf32>
    %53 = vector.extract_strided_slice %52 {offsets = [0, 0], sizes = [2, 8], strides = [1, 1]} : vector<2x16xf32> to vector<2x8xf32>
    %54 = vector.extract_strided_slice %52 {offsets = [0, 8], sizes = [2, 8], strides = [1, 1]} : vector<2x16xf32> to vector<2x8xf32>
    %55 = vector.extract_strided_slice %43 {offsets = [0, 16], sizes = [2, 8], strides = [1, 1]} : vector<2x24xf32> to vector<2x8xf32>
    %56 = vector.extract_strided_slice %44 {offsets = [0, 16], sizes = [2, 8], strides = [1, 1]} : vector<2x24xf32> to vector<2x8xf32>
    %57 = arith.addf %56, %4 : vector<2x8xf32>
    %58 = arith.mulf %53, %57 : vector<2x8xf32>
    %59 = arith.addf %55, %58 : vector<2x8xf32>
    %60 = math.tanh %59 : vector<2x8xf32>
    %cst_13 = arith.constant 1.000000e+00 : f32
    %61 = vector.broadcast %cst_13 : f32 to vector<2x8xf32>
    %62 = arith.subf %61, %54 : vector<2x8xf32>
    %63 = arith.mulf %62, %60 : vector<2x8xf32>
    %64 = arith.mulf %54, %40 : vector<2x8xf32>
    %65 = arith.addf %63, %64 : vector<2x8xf32>
    %66 = vector.extract_strided_slice %12 {offsets = [2, 0], sizes = [1, 24], strides = [1, 1]} : vector<8x24xf32> to vector<1x24xf32>
    %67 = vector.extract_strided_slice %13 {offsets = [2, 0], sizes = [1, 24], strides = [1, 1]} : vector<8x24xf32> to vector<1x24xf32>
    %68 = tpu.concatenate %66, %67 in 0 : vector<1x24xf32>, vector<1x24xf32> -> vector<2x24xf32>
    %cst_14 = arith.constant dense<0.000000e+00> : vector<2x24xf32>
    %69 = tpu.matmul %65, %14, %cst_14 {dimension_numbers = #tpu.dot_dimension_numbers<[1], [0], [0], [1], [0, 0, 1, 1], [], []>} : vector<2x8xf32>, vector<8x24xf32>, vector<2x24xf32> -> vector<2x24xf32>
    %70 = vector.extract_strided_slice %68 {offsets = [0, 0], sizes = [2, 16], strides = [1, 1]} : vector<2x24xf32> to vector<2x16xf32>
    %71 = vector.extract_strided_slice %69 {offsets = [0, 0], sizes = [2, 16], strides = [1, 1]} : vector<2x24xf32> to vector<2x16xf32>
    %72 = arith.addf %70, %71 : vector<2x16xf32>
    %73 = arith.negf %72 : vector<2x16xf32>
    %74 = math.exp %73 : vector<2x16xf32>
    %cst_15 = arith.constant 1.000000e+00 : f32
    %75 = vector.broadcast %cst_15 : f32 to vector<2x16xf32>
    %76 = arith.addf %75, %74 : vector<2x16xf32>
    %77 = arith.divf %75, %76 : vector<2x16xf32>
    %78 = vector.extract_strided_slice %77 {offsets = [0, 0], sizes = [2, 8], strides = [1, 1]} : vector<2x16xf32> to vector<2x8xf32>
    %79 = vector.extract_strided_slice %77 {offsets = [0, 8], sizes = [2, 8], strides = [1, 1]} : vector<2x16xf32> to vector<2x8xf32>
    %80 = vector.extract_strided_slice %68 {offsets = [0, 16], sizes = [2, 8], strides = [1, 1]} : vector<2x24xf32> to vector<2x8xf32>
    %81 = vector.extract_strided_slice %69 {offsets = [0, 16], sizes = [2, 8], strides = [1, 1]} : vector<2x24xf32> to vector<2x8xf32>
    %82 = arith.addf %81, %4 : vector<2x8xf32>
    %83 = arith.mulf %78, %82 : vector<2x8xf32>
    %84 = arith.addf %80, %83 : vector<2x8xf32>
    %85 = math.tanh %84 : vector<2x8xf32>
    %cst_16 = arith.constant 1.000000e+00 : f32
    %86 = vector.broadcast %cst_16 : f32 to vector<2x8xf32>
    %87 = arith.subf %86, %79 : vector<2x8xf32>
    %88 = arith.mulf %87, %85 : vector<2x8xf32>
    %89 = arith.mulf %79, %65 : vector<2x8xf32>
    %90 = arith.addf %88, %89 : vector<2x8xf32>
    %91 = vector.extract_strided_slice %12 {offsets = [3, 0], sizes = [1, 24], strides = [1, 1]} : vector<8x24xf32> to vector<1x24xf32>
    %92 = vector.extract_strided_slice %13 {offsets = [3, 0], sizes = [1, 24], strides = [1, 1]} : vector<8x24xf32> to vector<1x24xf32>
    %93 = tpu.concatenate %91, %92 in 0 : vector<1x24xf32>, vector<1x24xf32> -> vector<2x24xf32>
    %cst_17 = arith.constant dense<0.000000e+00> : vector<2x24xf32>
    %94 = tpu.matmul %90, %14, %cst_17 {dimension_numbers = #tpu.dot_dimension_numbers<[1], [0], [0], [1], [0, 0, 1, 1], [], []>} : vector<2x8xf32>, vector<8x24xf32>, vector<2x24xf32> -> vector<2x24xf32>
    %95 = vector.extract_strided_slice %93 {offsets = [0, 0], sizes = [2, 16], strides = [1, 1]} : vector<2x24xf32> to vector<2x16xf32>
    %96 = vector.extract_strided_slice %94 {offsets = [0, 0], sizes = [2, 16], strides = [1, 1]} : vector<2x24xf32> to vector<2x16xf32>
    %97 = arith.addf %95, %96 : vector<2x16xf32>
    %98 = arith.negf %97 : vector<2x16xf32>
    %99 = math.exp %98 : vector<2x16xf32>
    %cst_18 = arith.constant 1.000000e+00 : f32
    %100 = vector.broadcast %cst_18 : f32 to vector<2x16xf32>
    %101 = arith.addf %100, %99 : vector<2x16xf32>
    %102 = arith.divf %100, %101 : vector<2x16xf32>
    %103 = vector.extract_strided_slice %102 {offsets = [0, 0], sizes = [2, 8], strides = [1, 1]} : vector<2x16xf32> to vector<2x8xf32>
    %104 = vector.extract_strided_slice %102 {offsets = [0, 8], sizes = [2, 8], strides = [1, 1]} : vector<2x16xf32> to vector<2x8xf32>
    %105 = vector.extract_strided_slice %93 {offsets = [0, 16], sizes = [2, 8], strides = [1, 1]} : vector<2x24xf32> to vector<2x8xf32>
    %106 = vector.extract_strided_slice %94 {offsets = [0, 16], sizes = [2, 8], strides = [1, 1]} : vector<2x24xf32> to vector<2x8xf32>
    %107 = arith.addf %106, %4 : vector<2x8xf32>
    %108 = arith.mulf %103, %107 : vector<2x8xf32>
    %109 = arith.addf %105, %108 : vector<2x8xf32>
    %110 = math.tanh %109 : vector<2x8xf32>
    %cst_19 = arith.constant 1.000000e+00 : f32
    %111 = vector.broadcast %cst_19 : f32 to vector<2x8xf32>
    %112 = arith.subf %111, %104 : vector<2x8xf32>
    %113 = arith.mulf %112, %110 : vector<2x8xf32>
    %114 = arith.mulf %104, %90 : vector<2x8xf32>
    %115 = arith.addf %113, %114 : vector<2x8xf32>
    %116 = vector.extract_strided_slice %12 {offsets = [4, 0], sizes = [1, 24], strides = [1, 1]} : vector<8x24xf32> to vector<1x24xf32>
    %117 = vector.extract_strided_slice %13 {offsets = [4, 0], sizes = [1, 24], strides = [1, 1]} : vector<8x24xf32> to vector<1x24xf32>
    %118 = tpu.concatenate %116, %117 in 0 : vector<1x24xf32>, vector<1x24xf32> -> vector<2x24xf32>
    %cst_20 = arith.constant dense<0.000000e+00> : vector<2x24xf32>
    %119 = tpu.matmul %115, %14, %cst_20 {dimension_numbers = #tpu.dot_dimension_numbers<[1], [0], [0], [1], [0, 0, 1, 1], [], []>} : vector<2x8xf32>, vector<8x24xf32>, vector<2x24xf32> -> vector<2x24xf32>
    %120 = vector.extract_strided_slice %118 {offsets = [0, 0], sizes = [2, 16], strides = [1, 1]} : vector<2x24xf32> to vector<2x16xf32>
    %121 = vector.extract_strided_slice %119 {offsets = [0, 0], sizes = [2, 16], strides = [1, 1]} : vector<2x24xf32> to vector<2x16xf32>
    %122 = arith.addf %120, %121 : vector<2x16xf32>
    %123 = arith.negf %122 : vector<2x16xf32>
    %124 = math.exp %123 : vector<2x16xf32>
    %cst_21 = arith.constant 1.000000e+00 : f32
    %125 = vector.broadcast %cst_21 : f32 to vector<2x16xf32>
    %126 = arith.addf %125, %124 : vector<2x16xf32>
    %127 = arith.divf %125, %126 : vector<2x16xf32>
    %128 = vector.extract_strided_slice %127 {offsets = [0, 0], sizes = [2, 8], strides = [1, 1]} : vector<2x16xf32> to vector<2x8xf32>
    %129 = vector.extract_strided_slice %127 {offsets = [0, 8], sizes = [2, 8], strides = [1, 1]} : vector<2x16xf32> to vector<2x8xf32>
    %130 = vector.extract_strided_slice %118 {offsets = [0, 16], sizes = [2, 8], strides = [1, 1]} : vector<2x24xf32> to vector<2x8xf32>
    %131 = vector.extract_strided_slice %119 {offsets = [0, 16], sizes = [2, 8], strides = [1, 1]} : vector<2x24xf32> to vector<2x8xf32>
    %132 = arith.addf %131, %4 : vector<2x8xf32>
    %133 = arith.mulf %128, %132 : vector<2x8xf32>
    %134 = arith.addf %130, %133 : vector<2x8xf32>
    %135 = math.tanh %134 : vector<2x8xf32>
    %cst_22 = arith.constant 1.000000e+00 : f32
    %136 = vector.broadcast %cst_22 : f32 to vector<2x8xf32>
    %137 = arith.subf %136, %129 : vector<2x8xf32>
    %138 = arith.mulf %137, %135 : vector<2x8xf32>
    %139 = arith.mulf %129, %115 : vector<2x8xf32>
    %140 = arith.addf %138, %139 : vector<2x8xf32>
    %141 = vector.extract_strided_slice %12 {offsets = [5, 0], sizes = [1, 24], strides = [1, 1]} : vector<8x24xf32> to vector<1x24xf32>
    %142 = vector.extract_strided_slice %13 {offsets = [5, 0], sizes = [1, 24], strides = [1, 1]} : vector<8x24xf32> to vector<1x24xf32>
    %143 = tpu.concatenate %141, %142 in 0 : vector<1x24xf32>, vector<1x24xf32> -> vector<2x24xf32>
    %cst_23 = arith.constant dense<0.000000e+00> : vector<2x24xf32>
    %144 = tpu.matmul %140, %14, %cst_23 {dimension_numbers = #tpu.dot_dimension_numbers<[1], [0], [0], [1], [0, 0, 1, 1], [], []>} : vector<2x8xf32>, vector<8x24xf32>, vector<2x24xf32> -> vector<2x24xf32>
    %145 = vector.extract_strided_slice %143 {offsets = [0, 0], sizes = [2, 16], strides = [1, 1]} : vector<2x24xf32> to vector<2x16xf32>
    %146 = vector.extract_strided_slice %144 {offsets = [0, 0], sizes = [2, 16], strides = [1, 1]} : vector<2x24xf32> to vector<2x16xf32>
    %147 = arith.addf %145, %146 : vector<2x16xf32>
    %148 = arith.negf %147 : vector<2x16xf32>
    %149 = math.exp %148 : vector<2x16xf32>
    %cst_24 = arith.constant 1.000000e+00 : f32
    %150 = vector.broadcast %cst_24 : f32 to vector<2x16xf32>
    %151 = arith.addf %150, %149 : vector<2x16xf32>
    %152 = arith.divf %150, %151 : vector<2x16xf32>
    %153 = vector.extract_strided_slice %152 {offsets = [0, 0], sizes = [2, 8], strides = [1, 1]} : vector<2x16xf32> to vector<2x8xf32>
    %154 = vector.extract_strided_slice %152 {offsets = [0, 8], sizes = [2, 8], strides = [1, 1]} : vector<2x16xf32> to vector<2x8xf32>
    %155 = vector.extract_strided_slice %143 {offsets = [0, 16], sizes = [2, 8], strides = [1, 1]} : vector<2x24xf32> to vector<2x8xf32>
    %156 = vector.extract_strided_slice %144 {offsets = [0, 16], sizes = [2, 8], strides = [1, 1]} : vector<2x24xf32> to vector<2x8xf32>
    %157 = arith.addf %156, %4 : vector<2x8xf32>
    %158 = arith.mulf %153, %157 : vector<2x8xf32>
    %159 = arith.addf %155, %158 : vector<2x8xf32>
    %160 = math.tanh %159 : vector<2x8xf32>
    %cst_25 = arith.constant 1.000000e+00 : f32
    %161 = vector.broadcast %cst_25 : f32 to vector<2x8xf32>
    %162 = arith.subf %161, %154 : vector<2x8xf32>
    %163 = arith.mulf %162, %160 : vector<2x8xf32>
    %164 = arith.mulf %154, %140 : vector<2x8xf32>
    %165 = arith.addf %163, %164 : vector<2x8xf32>
    %166 = vector.extract_strided_slice %12 {offsets = [6, 0], sizes = [1, 24], strides = [1, 1]} : vector<8x24xf32> to vector<1x24xf32>
    %167 = vector.extract_strided_slice %13 {offsets = [6, 0], sizes = [1, 24], strides = [1, 1]} : vector<8x24xf32> to vector<1x24xf32>
    %168 = tpu.concatenate %166, %167 in 0 : vector<1x24xf32>, vector<1x24xf32> -> vector<2x24xf32>
    %cst_26 = arith.constant dense<0.000000e+00> : vector<2x24xf32>
    %169 = tpu.matmul %165, %14, %cst_26 {dimension_numbers = #tpu.dot_dimension_numbers<[1], [0], [0], [1], [0, 0, 1, 1], [], []>} : vector<2x8xf32>, vector<8x24xf32>, vector<2x24xf32> -> vector<2x24xf32>
    %170 = vector.extract_strided_slice %168 {offsets = [0, 0], sizes = [2, 16], strides = [1, 1]} : vector<2x24xf32> to vector<2x16xf32>
    %171 = vector.extract_strided_slice %169 {offsets = [0, 0], sizes = [2, 16], strides = [1, 1]} : vector<2x24xf32> to vector<2x16xf32>
    %172 = arith.addf %170, %171 : vector<2x16xf32>
    %173 = arith.negf %172 : vector<2x16xf32>
    %174 = math.exp %173 : vector<2x16xf32>
    %cst_27 = arith.constant 1.000000e+00 : f32
    %175 = vector.broadcast %cst_27 : f32 to vector<2x16xf32>
    %176 = arith.addf %175, %174 : vector<2x16xf32>
    %177 = arith.divf %175, %176 : vector<2x16xf32>
    %178 = vector.extract_strided_slice %177 {offsets = [0, 0], sizes = [2, 8], strides = [1, 1]} : vector<2x16xf32> to vector<2x8xf32>
    %179 = vector.extract_strided_slice %177 {offsets = [0, 8], sizes = [2, 8], strides = [1, 1]} : vector<2x16xf32> to vector<2x8xf32>
    %180 = vector.extract_strided_slice %168 {offsets = [0, 16], sizes = [2, 8], strides = [1, 1]} : vector<2x24xf32> to vector<2x8xf32>
    %181 = vector.extract_strided_slice %169 {offsets = [0, 16], sizes = [2, 8], strides = [1, 1]} : vector<2x24xf32> to vector<2x8xf32>
    %182 = arith.addf %181, %4 : vector<2x8xf32>
    %183 = arith.mulf %178, %182 : vector<2x8xf32>
    %184 = arith.addf %180, %183 : vector<2x8xf32>
    %185 = math.tanh %184 : vector<2x8xf32>
    %cst_28 = arith.constant 1.000000e+00 : f32
    %186 = vector.broadcast %cst_28 : f32 to vector<2x8xf32>
    %187 = arith.subf %186, %179 : vector<2x8xf32>
    %188 = arith.mulf %187, %185 : vector<2x8xf32>
    %189 = arith.mulf %179, %165 : vector<2x8xf32>
    %190 = arith.addf %188, %189 : vector<2x8xf32>
    %191 = vector.extract_strided_slice %12 {offsets = [7, 0], sizes = [1, 24], strides = [1, 1]} : vector<8x24xf32> to vector<1x24xf32>
    %192 = vector.extract_strided_slice %13 {offsets = [7, 0], sizes = [1, 24], strides = [1, 1]} : vector<8x24xf32> to vector<1x24xf32>
    %193 = tpu.concatenate %191, %192 in 0 : vector<1x24xf32>, vector<1x24xf32> -> vector<2x24xf32>
    %cst_29 = arith.constant dense<0.000000e+00> : vector<2x24xf32>
    %194 = tpu.matmul %190, %14, %cst_29 {dimension_numbers = #tpu.dot_dimension_numbers<[1], [0], [0], [1], [0, 0, 1, 1], [], []>} : vector<2x8xf32>, vector<8x24xf32>, vector<2x24xf32> -> vector<2x24xf32>
    %195 = vector.extract_strided_slice %193 {offsets = [0, 0], sizes = [2, 16], strides = [1, 1]} : vector<2x24xf32> to vector<2x16xf32>
    %196 = vector.extract_strided_slice %194 {offsets = [0, 0], sizes = [2, 16], strides = [1, 1]} : vector<2x24xf32> to vector<2x16xf32>
    %197 = arith.addf %195, %196 : vector<2x16xf32>
    %198 = arith.negf %197 : vector<2x16xf32>
    %199 = math.exp %198 : vector<2x16xf32>
    %cst_30 = arith.constant 1.000000e+00 : f32
    %200 = vector.broadcast %cst_30 : f32 to vector<2x16xf32>
    %201 = arith.addf %200, %199 : vector<2x16xf32>
    %202 = arith.divf %200, %201 : vector<2x16xf32>
    %203 = vector.extract_strided_slice %202 {offsets = [0, 0], sizes = [2, 8], strides = [1, 1]} : vector<2x16xf32> to vector<2x8xf32>
    %204 = vector.extract_strided_slice %202 {offsets = [0, 8], sizes = [2, 8], strides = [1, 1]} : vector<2x16xf32> to vector<2x8xf32>
    %205 = vector.extract_strided_slice %193 {offsets = [0, 16], sizes = [2, 8], strides = [1, 1]} : vector<2x24xf32> to vector<2x8xf32>
    %206 = vector.extract_strided_slice %194 {offsets = [0, 16], sizes = [2, 8], strides = [1, 1]} : vector<2x24xf32> to vector<2x8xf32>
    %207 = arith.addf %206, %4 : vector<2x8xf32>
    %208 = arith.mulf %203, %207 : vector<2x8xf32>
    %209 = arith.addf %205, %208 : vector<2x8xf32>
    %210 = math.tanh %209 : vector<2x8xf32>
    %cst_31 = arith.constant 1.000000e+00 : f32
    %211 = vector.broadcast %cst_31 : f32 to vector<2x8xf32>
    %212 = arith.subf %211, %204 : vector<2x8xf32>
    %213 = arith.mulf %212, %210 : vector<2x8xf32>
    %214 = arith.mulf %204, %190 : vector<2x8xf32>
    %215 = arith.addf %213, %214 : vector<2x8xf32>
    %c0_32 = arith.constant 0 : index
    %c0_33 = arith.constant 0 : index
    %216 = vector.load %arg7[%c0_32, %c0_33] : memref<2x8xf32, #tpu.memory_space<vmem>>, vector<2x8xf32>
    tpu.vector_store %arg7[%c0_32, %c0_33], %215 {strides = array<i32>} : memref<2x8xf32, #tpu.memory_space<vmem>>, vector<2x8xf32>,
    %217 = vector.extract_strided_slice %40 {offsets = [0, 0], sizes = [1, 8], strides = [1, 1]} : vector<2x8xf32> to vector<1x8xf32>
    %218 = vector.extract_strided_slice %65 {offsets = [0, 0], sizes = [1, 8], strides = [1, 1]} : vector<2x8xf32> to vector<1x8xf32>
    %219 = vector.extract_strided_slice %90 {offsets = [0, 0], sizes = [1, 8], strides = [1, 1]} : vector<2x8xf32> to vector<1x8xf32>
    %220 = vector.extract_strided_slice %115 {offsets = [0, 0], sizes = [1, 8], strides = [1, 1]} : vector<2x8xf32> to vector<1x8xf32>
    %221 = vector.extract_strided_slice %140 {offsets = [0, 0], sizes = [1, 8], strides = [1, 1]} : vector<2x8xf32> to vector<1x8xf32>
    %222 = vector.extract_strided_slice %165 {offsets = [0, 0], sizes = [1, 8], strides = [1, 1]} : vector<2x8xf32> to vector<1x8xf32>
    %223 = vector.extract_strided_slice %190 {offsets = [0, 0], sizes = [1, 8], strides = [1, 1]} : vector<2x8xf32> to vector<1x8xf32>
    %224 = vector.extract_strided_slice %215 {offsets = [0, 0], sizes = [1, 8], strides = [1, 1]} : vector<2x8xf32> to vector<1x8xf32>
    %225 = tpu.concatenate %217, %218, %219, %220, %221, %222, %223, %224 in 0 : vector<1x8xf32>, vector<1x8xf32>, vector<1x8xf32>, vector<1x8xf32>, vector<1x8xf32>, vector<1x8xf32>, vector<1x8xf32>, vector<1x8xf32> -> vector<8x8xf32>
    %226 = vector.extract_strided_slice %40 {offsets = [1, 0], sizes = [1, 8], strides = [1, 1]} : vector<2x8xf32> to vector<1x8xf32>
    %227 = vector.extract_strided_slice %65 {offsets = [1, 0], sizes = [1, 8], strides = [1, 1]} : vector<2x8xf32> to vector<1x8xf32>
    %228 = vector.extract_strided_slice %90 {offsets = [1, 0], sizes = [1, 8], strides = [1, 1]} : vector<2x8xf32> to vector<1x8xf32>
    %229 = vector.extract_strided_slice %115 {offsets = [1, 0], sizes = [1, 8], strides = [1, 1]} : vector<2x8xf32> to vector<1x8xf32>
    %230 = vector.extract_strided_slice %140 {offsets = [1, 0], sizes = [1, 8], strides = [1, 1]} : vector<2x8xf32> to vector<1x8xf32>
    %231 = vector.extract_strided_slice %165 {offsets = [1, 0], sizes = [1, 8], strides = [1, 1]} : vector<2x8xf32> to vector<1x8xf32>
    %232 = vector.extract_strided_slice %190 {offsets = [1, 0], sizes = [1, 8], strides = [1, 1]} : vector<2x8xf32> to vector<1x8xf32>
    %233 = vector.extract_strided_slice %215 {offsets = [1, 0], sizes = [1, 8], strides = [1, 1]} : vector<2x8xf32> to vector<1x8xf32>
    %234 = tpu.concatenate %226, %227, %228, %229, %230, %231, %232, %233 in 0 : vector<1x8xf32>, vector<1x8xf32>, vector<1x8xf32>, vector<1x8xf32>, vector<1x8xf32>, vector<1x8xf32>, vector<1x8xf32>, vector<1x8xf32> -> vector<8x8xf32>
    %235 = tpu.concatenate %225, %234 in 0 : vector<8x8xf32>, vector<8x8xf32> -> vector<16x8xf32>
    %c0_34 = arith.constant 0 : index
    %c0_35 = arith.constant 0 : index
    %236 = vector.load %arg4[%c0_34, %c0_35] : memref<8x8xf32, #tpu.memory_space<vmem>>, vector<8x8xf32>
    %cst_36 = arith.constant dense<0.000000e+00> : vector<16x8xf32>
    %237 = tpu.matmul %235, %236, %cst_36 {dimension_numbers = #tpu.dot_dimension_numbers<[1], [0], [0], [1], [0, 0, 1, 1], [], []>} : vector<16x8xf32>, vector<8x8xf32>, vector<16x8xf32> -> vector<16x8xf32>
    %238 = vector.broadcast %5 : vector<1x8xf32> to vector<16x8xf32>
    %239 = arith.addf %237, %238 : vector<16x8xf32>
    %cst_37 = arith.constant 0.000000e+00 : f32
    %240 = vector.broadcast %cst_37 : f32 to vector<16x8xf32>
    %241 = arith.maximumf %239, %240 : vector<16x8xf32>
    %c0_38 = arith.constant 0 : index
    %c0_39 = arith.constant 0 : index
    %242 = vector.load %arg5[%c0_38, %c0_39] : memref<8x10xf32, #tpu.memory_space<vmem>>, vector<8x10xf32>
    %cst_40 = arith.constant dense<0.000000e+00> : vector<16x10xf32>
    %243 = tpu.matmul %241, %242, %cst_40 {dimension_numbers = #tpu.dot_dimension_numbers<[1], [0], [0], [1], [0, 0, 1, 1], [], []>} : vector<16x8xf32>, vector<8x10xf32>, vector<16x10xf32> -> vector<16x10xf32>
    %244 = vector.broadcast %6 : vector<1x10xf32> to vector<16x10xf32>
    %245 = arith.addf %243, %244 : vector<16x10xf32>
    %cst_41 = arith.constant dense<0xFF800000> : vector<16xf32>
    %246 = vector.multi_reduction <maximumf>, %245, %cst_41 [1] : vector<16x10xf32> to vector<16xf32>
    %247 = vector.shape_cast %246 : vector<16xf32> to vector<16x1xf32>
    %248 = vector.broadcast %247 : vector<16x1xf32> to vector<16x10xf32>
    %249 = arith.subf %245, %248 : vector<16x10xf32>
    %250 = math.exp %249 : vector<16x10xf32>
    %cst_42 = arith.constant dense<0.000000e+00> : vector<16xf32>
    %251 = vector.multi_reduction <add>, %250, %cst_42 [1] : vector<16x10xf32> to vector<16xf32>
    %252 = vector.shape_cast %251 : vector<16xf32> to vector<16x1xf32>
    %253 = math.log %252 : vector<16x1xf32>
    %254 = arith.addf %253, %247 : vector<16x1xf32>
    %255 = vector.broadcast %254 : vector<16x1xf32> to vector<16x10xf32>
    %256 = arith.subf %245, %255 : vector<16x10xf32>
    %c0_43 = arith.constant 0 : index
    %c0_44 = arith.constant 0 : index
    %257 = vector.load %arg6[%c0_43, %c0_44] : memref<16x10xf32, #tpu.memory_space<vmem>>, vector<16x10xf32>
    tpu.vector_store %arg6[%c0_43, %c0_44], %256 {strides = array<i32>} : memref<16x10xf32, #tpu.memory_space<vmem>>, vector<16x10xf32>,
    return
  }
}

</mosaic_0001>

<llo_original>
// kernel: network_forward.1
$region0: #{network_forward.1}
  #allocation0 [shape = 'u32[]', space=smem, size = 0x4, offset = 0x4, fixed_abs, tag = 'smem constant byte address 0x4 - core index']
  #allocation1 [shape = 'u32[72,128]{1,0:T(1,128)}', space=vmem, size = 0x9000, scoped, tag = 'internal scratch']
  %s0 = inlined_call_operand.vmem [shape: f32[16,10], index: 0, kind: input, shape index: {}]
  %s1 = inlined_call_operand.vmem [shape: f32[10,24], index: 1, kind: input, shape index: {}]
  %s2 = inlined_call_operand.vmem [shape: f32[8,24], index: 2, kind: input, shape index: {}]
  %s3 = inlined_call_operand.vmem [shape: f32[4,24], index: 3, kind: input, shape index: {}]
  %s4 = inlined_call_operand.vmem [shape: f32[8,8], index: 4, kind: input, shape index: {}]
  %s5 = inlined_call_operand.hbm [shape: f32[8,10], index: 5, kind: input, shape index: {}]
  %s6 = inlined_call_operand.hbm [shape: f32[16,10], index: 6, kind: output, shape index: {0}]
  %s7 = inlined_call_operand.hbm [shape: f32[2,8], index: 7, kind: output, shape index: {1}]
  %8 = xla_tuple %s6, %s7
  %s9 = sld [smem:[#allocation0]]
  $region46: #{network_forward.1} parent=0
    _
  %s11 = ssub.s32 1, %s9
  %s12 = scalar_select 0, %s11, %s9
  $region1: #{network_forward.1} parent=0
    #allocation2 [shape = 'u8[4096]{0}', space=vmem, size = 0x1000, scoped, tag = 'input window, operand 5, single buffered']
    #allocation3 [shape = 's32[1]{0}', space=sflag, size = 0x4, scoped, tag = 'scoped memory for network_forward.1']
    #allocation4 [shape = 's32[1]{0}', space=sflag, size = 0x4, scoped, tag = 'scoped memory for network_forward.1']
    #allocation5 [shape = 'u8[8192]{0}', space=vmem, size = 0x2000, scoped, tag = 'output window, operand 0, single buffered']
    #allocation6 [shape = 'u8[1024]{0}', space=vmem, size = 0x400, scoped, tag = 'output window, operand 1, single buffered']
    #allocation7 [shape = 's32[1]{0}', space=sflag, size = 0x4, scoped, tag = 'scoped memory for network_forward.1']
    %13 = vsyncpa [#allocation3], 0
    %14 = vsyncpa [#allocation4], 0
    %15 = vsyncpa [#allocation7], 0
    // Predicated region
    $region2: #{network_forward.1} parent=1 // pred_check
      _
    $region3: #{network_forward.1} parent=1 // pred_check_branch
      %17 = sbr.rel (0) target = $region5
    $region4: #{network_forward.1} parent=1 // pred_region
      _
    $region5: #{network_forward.1} parent=1 // pred_fallthru
      _
    // Predicated region
    $region6: #{network_forward.1} parent=1 // pred_check
      _
    $region7: #{network_forward.1} parent=1 // pred_check_branch
      %19 = sbr.rel (0) target = $region9
    $region8: #{network_forward.1} parent=1 // pred_region
      _
    $region9: #{network_forward.1} parent=1 // pred_fallthru
      _
    // Predicated region
    $region10: #{network_forward.1} parent=1 // pred_check
      _
    $region11: #{network_forward.1} parent=1 // pred_check_branch
      %21 = sbr.rel (0) target = $region13
    $region12: #{network_forward.1} parent=1 // pred_region
      _
    $region13: #{network_forward.1} parent=1 // pred_fallthru
      _
    // Predicated region
    $region14: #{network_forward.1} parent=1 // pred_check
      _
    $region15: #{network_forward.1} parent=1 // pred_check_branch
      %23 = sbr.rel (0) target = $region17
    $region16: #{network_forward.1} parent=1 // pred_region
      _
    $region17: #{network_forward.1} parent=1 // pred_fallthru
      _
    // Predicated region
    $region18: #{network_forward.1} parent=1 // pred_check
      _
    $region19: #{network_forward.1} parent=1 // pred_check_branch
      %25 = sbr.rel (0) target = $region21
    $region20: #{network_forward.1} parent=1 // pred_region
      _
    $region21: #{network_forward.1} parent=1 // pred_fallthru
      _
    // Predicated region
    $region22: #{network_forward.1} parent=1 // pred_check
      _
    $region23: #{network_forward.1} parent=1 // pred_check_branch
      %27 = sbr.rel (0) target = $region25
    $region24: #{network_forward.1} parent=1 // pred_region
      %29 = vsyncadd [#allocation3], 0
      %s31 = sshll.u32 %s5, 4
      %s32 = int_to_ptr.hbm [resolvable:$true] %s31
      %s33 = sshll.u32 [#allocation2], 4
      %s34 = int_to_ptr.vmem [resolvable:$true] %s33
      %36 = dma.hbm_to_vmem [thread:$0]  %s32, 128, %s34, [#allocation3]
    $region25: #{network_forward.1} parent=1 // pred_fallthru
      _
    // Predicated region
    $region26: #{network_forward.1} parent=1 // pred_check
      _
    $region27: #{network_forward.1} parent=1 // pred_check_branch
      %38 = sbr.rel (0) target = $region29
    $region28: #{network_forward.1} parent=1 // pred_region
      %40 = dma.done [#allocation3], 128
    $region29: #{network_forward.1} parent=1 // pred_fallthru
      _
    %v41 = vld [vmem:[%s3] sm:$0xf]
    %v42 = vperm.slane %v41, 1
    %v43 = vld [vmem:[%s0] sm:$0xff]
    %v44 = vld [vmem:[%s0 + $0x8] sm:$0xff]
    %v45 = vld [vmem:[%s1] sm:$0xff]
    %v46 = vld [vmem:[%s1 + $0x8] sm:$0x3]
    %v47 = vperm.slane %v41, 0
    %vm48 = vcmask 80896
    %v50 = vsel %vm48, %v43, 0
    %v53 = vsel %vm48, %v44, 0
    %vm55 = vcmask 1041408
    %v57 = vsel %vm55, %v46, 0
    %59 = vmatpush.msra.mxu0 0.0
    %60 = vmatpush.msra.mxu0 0.0
    %61 = vmatpush.msra.mxu0 0.0
    %62 = vmatpush.msra.mxu0 0.0
    %63 = vmatpush.msra.mxu0 0.0
    %64 = vmatpush.msra.mxu0 0.0
    %65 = vmatpush.msra.mxu0 0.0
    %66 = vmatpush.msra.mxu0 0.0
    %67 = vmatpush.msra.mxu0 0.0
    %68 = vmatpush.msra.mxu0 0.0
    %69 = vmatpush.msra.mxu0 0.0
    %70 = vmatpush.msra.mxu0 0.0
    %71 = vmatpush.msra.mxu0 0.0
    %72 = vmatpush.msra.mxu0 0.0
    %73 = vmatpush.msra.mxu0 %v57
    %74 = vmatpush.msra.mxu0 %v45
    %75 = vmatmul.f32.gmra.mxu0 %v50
    %v76 = vpop.f32.mrf.mxu0
    %v77 = vadd.f32 %v47, %v76
    %78 = vmatmul.f32.gmra.mxu0 %v53
    %v79 = vpop.f32.mrf.mxu0
    %v80 = vadd.f32 %v47, %v79
    %81 = vdwg.mxu0
    %v82 = vld [vmem:[%s2] sm:$0xff]
    %v84 = vrot.slane %v80, 7
    %vm86 = vcmask 1040384
    %v87 = vsel %vm86, %v77, %v84
    %vm88 = vcmask 64512
    %v90 = vsel %vm88, 0.0, 0
    %92 = vmatpush.msra.mxu0 0.0
    %93 = vmatpush.msra.mxu0 0.0
    %94 = vmatpush.msra.mxu0 0.0
    %95 = vmatpush.msra.mxu0 0.0
    %96 = vmatpush.msra.mxu0 0.0
    %97 = vmatpush.msra.mxu0 0.0
    %98 = vmatpush.msra.mxu0 0.0
    %99 = vmatpush.msra.mxu0 0.0
    %100 = vmatpush.msra.mxu0 0.0
    %101 = vmatpush.msra.mxu0 0.0
    %102 = vmatpush.msra.mxu0 0.0
    %103 = vmatpush.msra.mxu0 0.0
    %104 = vmatpush.msra.mxu0 0.0
    %105 = vmatpush.msra.mxu0 0.0
    %106 = vmatpush.msra.mxu0 0.0
    %107 = vmatpush.msra.mxu0 %v82
    %108 = vmatmul.f32.gmra.mxu0 %v90
    %v109 = vpop.f32.mrf.mxu0
    %v110 = vadd.f32 0.0, %v109
    %111 = vdwg.mxu0
    %v112 = vadd.f32 %v87, %v110
    %v113 = vxor.u32 %v112, 2147483648
    %v114 = vmul.f32 %v113, 1.442695
    %v115 = vpow.pop %v114
    %v116 = vadd.f32 %v115, 1.0
    %v117 = vrcp.pop %v116
    %v118 = vmul.f32 %v116, %v117
    %v119 = vsub.f32 1.0, %v118
    %v120 = vmul.f32 %v117, %v119
    %v121 = vadd.f32 %v117, %v120
    %vm122 = vweird.f32 %v116
    %vm123 = vweird.f32 %v117
    %vm124 = vmor %vm122, %vm123
    %v125 = vsel %vm124, %v117, %v121
    %v126 = vand.u32 2147483647, %v116
    %vm127 = vcmp.eq.f32.partialorder %v126, 8.507059e+37
    %v128 = vand.u32 %v116, 2147483648
    %v129 = vor.u32 1.1754944e-38, %v128
    %v130 = vsel %vm127, %v129, %v125
    %v131 = vmul.f32 1.0, %v130
    %133 = vrot.lane.b32.xlu0 %v42, 16
    %v134 = vpop.permute.xlu0 %133
    %v136 = vadd.f32 %v110, %v134
    %138 = vrot.lane.b32.xlu0 %v136, 112
    %v139 = vpop.permute.xlu0 %138
    %v141 = vmul.f32 %v131, %v139
    %143 = vrot.lane.b32.xlu0 %v141, 16
    %v144 = vpop.permute.xlu0 %143
    %v146 = vadd.f32 %v87, %v144
    %v147 = vtanh.pop %v146
    %v148 = vsub.f32 1.0, %v131
    %150 = vrot.lane.b32.xlu0 %v147, 120
    %v151 = vpop.permute.xlu0 %150
    %v153 = vmul.f32 %v148, %v151
    %v154 = vmul.f32 %v131, 0.0
    %v155 = vadd.f32 %v153, %v154
    %v157 = vrot.slane %v77, 1
    %v159 = vsel %vm86, %v157, %v80
    %161 = vrot.lane.b32.xlu0 %v155, 120
    %v162 = vpop.permute.xlu0 %161
    %v163 = vsel %vm88, %v162, 0
    %165 = vmatpush.msra.mxu0 0.0
    %166 = vmatpush.msra.mxu0 0.0
    %167 = vmatpush.msra.mxu0 0.0
    %168 = vmatpush.msra.mxu0 0.0
    %169 = vmatpush.msra.mxu0 0.0
    %170 = vmatpush.msra.mxu0 0.0
    %171 = vmatpush.msra.mxu0 0.0
    %172 = vmatpush.msra.mxu0 0.0
    %173 = vmatpush.msra.mxu0 0.0
    %174 = vmatpush.msra.mxu0 0.0
    %175 = vmatpush.msra.mxu0 0.0
    %176 = vmatpush.msra.mxu0 0.0
    %177 = vmatpush.msra.mxu0 0.0
    %178 = vmatpush.msra.mxu0 0.0
    %179 = vmatpush.msra.mxu0 0.0
    %180 = vmatpush.msra.mxu0 %v82
    %181 = vmatmul.f32.gmra.mxu0 %v163
    %v182 = vpop.f32.mrf.mxu0
    %v183 = vadd.f32 0.0, %v182
    %184 = vdwg.mxu0
    %v185 = vadd.f32 %v159, %v183
    %v186 = vxor.u32 %v185, 2147483648
    %v187 = vmul.f32 %v186, 1.442695
    %v188 = vpow.pop %v187
    %v189 = vadd.f32 %v188, 1.0
    %v190 = vrcp.pop %v189
    %v191 = vmul.f32 %v189, %v190
    %v192 = vsub.f32 1.0, %v191
    %v193 = vmul.f32 %v190, %v192
    %v194 = vadd.f32 %v190, %v193
    %vm195 = vweird.f32 %v189
    %vm196 = vweird.f32 %v190
    %vm197 = vmor %vm195, %vm196
    %v198 = vsel %vm197, %v190, %v194
    %v199 = vand.u32 2147483647, %v189
    %vm200 = vcmp.eq.f32.partialorder %v199, 8.507059e+37
    %v201 = vand.u32 %v189, 2147483648
    %v202 = vor.u32 1.1754944e-38, %v201
    %v203 = vsel %vm200, %v202, %v198
    %v204 = vmul.f32 1.0, %v203
    %v205 = vadd.f32 %v183, %v134
    %207 = vrot.lane.b32.xlu0 %v205, 112
    %v208 = vpop.permute.xlu0 %207
    %v210 = vmul.f32 %v204, %v208
    %212 = vrot.lane.b32.xlu0 %v210, 16
    %v213 = vpop.permute.xlu0 %212
    %v215 = vadd.f32 %v159, %v213
    %v216 = vtanh.pop %v215
    %v217 = vsub.f32 1.0, %v204
    %219 = vrot.lane.b32.xlu0 %v216, 120
    %v220 = vpop.permute.xlu0 %219
    %v222 = vmul.f32 %v217, %v220
    %v223 = vmul.f32 %v204, %v155
    %v224 = vadd.f32 %v222, %v223
    %v225 = vrot.slane %v77, 2
    %v227 = vrot.slane %v80, 1
    %v229 = vsel %vm86, %v225, %v227
    %231 = vrot.lane.b32.xlu0 %v224, 120
    %v232 = vpop.permute.xlu0 %231
    %v233 = vsel %vm88, %v232, 0
    %235 = vmatpush.msra.mxu0 0.0
    %236 = vmatpush.msra.mxu0 0.0
    %237 = vmatpush.msra.mxu0 0.0
    %238 = vmatpush.msra.mxu0 0.0
    %239 = vmatpush.msra.mxu0 0.0
    %240 = vmatpush.msra.mxu0 0.0
    %241 = vmatpush.msra.mxu0 0.0
    %242 = vmatpush.msra.mxu0 0.0
    %243 = vmatpush.msra.mxu0 0.0
    %244 = vmatpush.msra.mxu0 0.0
    %245 = vmatpush.msra.mxu0 0.0
    %246 = vmatpush.msra.mxu0 0.0
    %247 = vmatpush.msra.mxu0 0.0
    %248 = vmatpush.msra.mxu0 0.0
    %249 = vmatpush.msra.mxu0 0.0
    %250 = vmatpush.msra.mxu0 %v82
    %251 = vmatmul.f32.gmra.mxu0 %v233
    %v252 = vpop.f32.mrf.mxu0
    %v253 = vadd.f32 0.0, %v252
    %254 = vdwg.mxu0
    %v255 = vadd.f32 %v229, %v253
    %v256 = vxor.u32 %v255, 2147483648
    %v257 = vmul.f32 %v256, 1.442695
    %v258 = vpow.pop %v257
    %v259 = vadd.f32 %v258, 1.0
    %v260 = vrcp.pop %v259
    %v261 = vmul.f32 %v259, %v260
    %v262 = vsub.f32 1.0, %v261
    %v263 = vmul.f32 %v260, %v262
    %v264 = vadd.f32 %v260, %v263
    %vm265 = vweird.f32 %v259
    %vm266 = vweird.f32 %v260
    %vm267 = vmor %vm265, %vm266
    %v268 = vsel %vm267, %v260, %v264
    %v269 = vand.u32 2147483647, %v259
    %vm270 = vcmp.eq.f32.partialorder %v269, 8.507059e+37
    %v271 = vand.u32 %v259, 2147483648
    %v272 = vor.u32 1.1754944e-38, %v271
    %v273 = vsel %vm270, %v272, %v268
    %v274 = vmul.f32 1.0, %v273
    %v275 = vadd.f32 %v253, %v134
    %277 = vrot.lane.b32.xlu0 %v275, 112
    %v278 = vpop.permute.xlu0 %277
    %v280 = vmul.f32 %v274, %v278
    %282 = vrot.lane.b32.xlu0 %v280, 16
    %v283 = vpop.permute.xlu0 %282
    %v285 = vadd.f32 %v229, %v283
    %v286 = vtanh.pop %v285
    %v287 = vsub.f32 1.0, %v274
    %289 = vrot.lane.b32.xlu0 %v286, 120
    %v290 = vpop.permute.xlu0 %289
    %v292 = vmul.f32 %v287, %v290
    %v293 = vmul.f32 %v274, %v224
    %v294 = vadd.f32 %v292, %v293
    %v295 = vrot.slane %v77, 3
    %v297 = vrot.slane %v80, 2
    %v299 = vsel %vm86, %v295, %v297
    %301 = vrot.lane.b32.xlu0 %v294, 120
    %v302 = vpop.permute.xlu0 %301
    %v303 = vsel %vm88, %v302, 0
    %305 = vmatpush.msra.mxu0 0.0
    %306 = vmatpush.msra.mxu0 0.0
    %307 = vmatpush.msra.mxu0 0.0
    %308 = vmatpush.msra.mxu0 0.0
    %309 = vmatpush.msra.mxu0 0.0
    %310 = vmatpush.msra.mxu0 0.0
    %311 = vmatpush.msra.mxu0 0.0
    %312 = vmatpush.msra.mxu0 0.0
    %313 = vmatpush.msra.mxu0 0.0
    %314 = vmatpush.msra.mxu0 0.0
    %315 = vmatpush.msra.mxu0 0.0
    %316 = vmatpush.msra.mxu0 0.0
    %317 = vmatpush.msra.mxu0 0.0
    %318 = vmatpush.msra.mxu0 0.0
    %319 = vmatpush.msra.mxu0 0.0
    %320 = vmatpush.msra.mxu0 %v82
    %321 = vmatmul.f32.gmra.mxu0 %v303
    %v322 = vpop.f32.mrf.mxu0
    %v323 = vadd.f32 0.0, %v322
    %324 = vdwg.mxu0
    %v325 = vadd.f32 %v299, %v323
    %v326 = vxor.u32 %v325, 2147483648
    %v327 = vmul.f32 %v326, 1.442695
    %v328 = vpow.pop %v327
    %v329 = vadd.f32 %v328, 1.0
    %v330 = vrcp.pop %v329
    %v331 = vmul.f32 %v329, %v330
    %v332 = vsub.f32 1.0, %v331
    %v333 = vmul.f32 %v330, %v332
    %v334 = vadd.f32 %v330, %v333
    %vm335 = vweird.f32 %v329
    %vm336 = vweird.f32 %v330
    %vm337 = vmor %vm335, %vm336
    %v338 = vsel %vm337, %v330, %v334
    %v339 = vand.u32 2147483647, %v329
    %vm340 = vcmp.eq.f32.partialorder %v339, 8.507059e+37
    %v341 = vand.u32 %v329, 2147483648
    %v342 = vor.u32 1.1754944e-38, %v341
    %v343 = vsel %vm340, %v342, %v338
    %v344 = vmul.f32 1.0, %v343
    %v345 = vadd.f32 %v323, %v134
    %347 = vrot.lane.b32.xlu0 %v345, 112
    %v348 = vpop.permute.xlu0 %347
    %v350 = vmul.f32 %v344, %v348
    %352 = vrot.lane.b32.xlu0 %v350, 16
    %v353 = vpop.permute.xlu0 %352
    %v355 = vadd.f32 %v299, %v353
    %v356 = vtanh.pop %v355
    %v357 = vsub.f32 1.0, %v344
    %359 = vrot.lane.b32.xlu0 %v356, 120
    %v360 = vpop.permute.xlu0 %359
    %v362 = vmul.f32 %v357, %v360
    %v363 = vmul.f32 %v344, %v294
    %v364 = vadd.f32 %v362, %v363
    %v365 = vrot.slane %v77, 4
    %v367 = vrot.slane %v80, 3
    %v369 = vsel %vm86, %v365, %v367
    %371 = vrot.lane.b32.xlu0 %v364, 120
    %v372 = vpop.permute.xlu0 %371
    %v373 = vsel %vm88, %v372, 0
    %375 = vmatpush.msra.mxu0 0.0
    %376 = vmatpush.msra.mxu0 0.0
    %377 = vmatpush.msra.mxu0 0.0
    %378 = vmatpush.msra.mxu0 0.0
    %379 = vmatpush.msra.mxu0 0.0
    %380 = vmatpush.msra.mxu0 0.0
    %381 = vmatpush.msra.mxu0 0.0
    %382 = vmatpush.msra.mxu0 0.0
    %383 = vmatpush.msra.mxu0 0.0
    %384 = vmatpush.msra.mxu0 0.0
    %385 = vmatpush.msra.mxu0 0.0
    %386 = vmatpush.msra.mxu0 0.0
    %387 = vmatpush.msra.mxu0 0.0
    %388 = vmatpush.msra.mxu0 0.0
    %389 = vmatpush.msra.mxu0 0.0
    %390 = vmatpush.msra.mxu0 %v82
    %391 = vmatmul.f32.gmra.mxu0 %v373
    %v392 = vpop.f32.mrf.mxu0
    %v393 = vadd.f32 0.0, %v392
    %394 = vdwg.mxu0
    %v395 = vadd.f32 %v369, %v393
    %v396 = vxor.u32 %v395, 2147483648
    %v397 = vmul.f32 %v396, 1.442695
    %v398 = vpow.pop %v397
    %v399 = vadd.f32 %v398, 1.0
    %v400 = vrcp.pop %v399
    %v401 = vmul.f32 %v399, %v400
    %v402 = vsub.f32 1.0, %v401
    %v403 = vmul.f32 %v400, %v402
    %v404 = vadd.f32 %v400, %v403
    %vm405 = vweird.f32 %v399
    %vm406 = vweird.f32 %v400
    %vm407 = vmor %vm405, %vm406
    %v408 = vsel %vm407, %v400, %v404
    %v409 = vand.u32 2147483647, %v399
    %vm410 = vcmp.eq.f32.partialorder %v409, 8.507059e+37
    %v411 = vand.u32 %v399, 2147483648
    %v412 = vor.u32 1.1754944e-38, %v411
    %v413 = vsel %vm410, %v412, %v408
    %v414 = vmul.f32 1.0, %v413
    %v415 = vadd.f32 %v393, %v134
    %417 = vrot.lane.b32.xlu0 %v415, 112
    %v418 = vpop.permute.xlu0 %417
    %v420 = vmul.f32 %v414, %v418
    %422 = vrot.lane.b32.xlu0 %v420, 16
    %v423 = vpop.permute.xlu0 %422
    %v425 = vadd.f32 %v369, %v423
    %v426 = vtanh.pop %v425
    %v427 = vsub.f32 1.0, %v414
    %429 = vrot.lane.b32.xlu0 %v426, 120
    %v430 = vpop.permute.xlu0 %429
    %v432 = vmul.f32 %v427, %v430
    %v433 = vmul.f32 %v414, %v364
    %v434 = vadd.f32 %v432, %v433
    %v435 = vrot.slane %v77, 5
    %v437 = vrot.slane %v80, 4
    %v439 = vsel %vm86, %v435, %v437
    %441 = vrot.lane.b32.xlu0 %v434, 120
    %v442 = vpop.permute.xlu0 %441
    %v443 = vsel %vm88, %v442, 0
    %445 = vmatpush.msra.mxu0 0.0
    %446 = vmatpush.msra.mxu0 0.0
    %447 = vmatpush.msra.mxu0 0.0
    %448 = vmatpush.msra.mxu0 0.0
    %449 = vmatpush.msra.mxu0 0.0
    %450 = vmatpush.msra.mxu0 0.0
    %451 = vmatpush.msra.mxu0 0.0
    %452 = vmatpush.msra.mxu0 0.0
    %453 = vmatpush.msra.mxu0 0.0
    %454 = vmatpush.msra.mxu0 0.0
    %455 = vmatpush.msra.mxu0 0.0
    %456 = vmatpush.msra.mxu0 0.0
    %457 = vmatpush.msra.mxu0 0.0
    %458 = vmatpush.msra.mxu0 0.0
    %459 = vmatpush.msra.mxu0 0.0
    %460 = vmatpush.msra.mxu0 %v82
    %461 = vmatmul.f32.gmra.mxu0 %v443
    %v462 = vpop.f32.mrf.mxu0
    %v463 = vadd.f32 0.0, %v462
    %464 = vdwg.mxu0
    %v465 = vadd.f32 %v439, %v463
    %v466 = vxor.u32 %v465, 2147483648
    %v467 = vmul.f32 %v466, 1.442695
    %v468 = vpow.pop %v467
    %v469 = vadd.f32 %v468, 1.0
    %v470 = vrcp.pop %v469
    %v471 = vmul.f32 %v469, %v470
    %v472 = vsub.f32 1.0, %v471
    %v473 = vmul.f32 %v470, %v472
    %v474 = vadd.f32 %v470, %v473
    %vm475 = vweird.f32 %v469
    %vm476 = vweird.f32 %v470
    %vm477 = vmor %vm475, %vm476
    %v478 = vsel %vm477, %v470, %v474
    %v479 = vand.u32 2147483647, %v469
    %vm480 = vcmp.eq.f32.partialorder %v479, 8.507059e+37
    %v481 = vand.u32 %v469, 2147483648
    %v482 = vor.u32 1.1754944e-38, %v481
    %v483 = vsel %vm480, %v482, %v478
    %v484 = vmul.f32 1.0, %v483
    %v485 = vadd.f32 %v463, %v134
    %487 = vrot.lane.b32.xlu0 %v485, 112
    %v488 = vpop.permute.xlu0 %487
    %v490 = vmul.f32 %v484, %v488
    %492 = vrot.lane.b32.xlu0 %v490, 16
    %v493 = vpop.permute.xlu0 %492
    %v495 = vadd.f32 %v439, %v493
    %v496 = vtanh.pop %v495
    %v497 = vsub.f32 1.0, %v484
    %499 = vrot.lane.b32.xlu0 %v496, 120
    %v500 = vpop.permute.xlu0 %499
    %v502 = vmul.f32 %v497, %v500
    %v503 = vmul.f32 %v484, %v434
    %v504 = vadd.f32 %v502, %v503
    %v505 = vrot.slane %v77, 6
    %v507 = vrot.slane %v80, 5
    %v509 = vsel %vm86, %v505, %v507
    %511 = vrot.lane.b32.xlu0 %v504, 120
    %v512 = vpop.permute.xlu0 %511
    %v513 = vsel %vm88, %v512, 0
    %515 = vmatpush.msra.mxu0 0.0
    %516 = vmatpush.msra.mxu0 0.0
    %517 = vmatpush.msra.mxu0 0.0
    %518 = vmatpush.msra.mxu0 0.0
    %519 = vmatpush.msra.mxu0 0.0
    %520 = vmatpush.msra.mxu0 0.0
    %521 = vmatpush.msra.mxu0 0.0
    %522 = vmatpush.msra.mxu0 0.0
    %523 = vmatpush.msra.mxu0 0.0
    %524 = vmatpush.msra.mxu0 0.0
    %525 = vmatpush.msra.mxu0 0.0
    %526 = vmatpush.msra.mxu0 0.0
    %527 = vmatpush.msra.mxu0 0.0
    %528 = vmatpush.msra.mxu0 0.0
    %529 = vmatpush.msra.mxu0 0.0
    %530 = vmatpush.msra.mxu0 %v82
    %531 = vmatmul.f32.gmra.mxu0 %v513
    %v532 = vpop.f32.mrf.mxu0
    %v533 = vadd.f32 0.0, %v532
    %534 = vdwg.mxu0
    %v535 = vadd.f32 %v509, %v533
    %v536 = vxor.u32 %v535, 2147483648
    %v537 = vmul.f32 %v536, 1.442695
    %v538 = vpow.pop %v537
    %v539 = vadd.f32 %v538, 1.0
    %v540 = vrcp.pop %v539
    %v541 = vmul.f32 %v539, %v540
    %v542 = vsub.f32 1.0, %v541
    %v543 = vmul.f32 %v540, %v542
    %v544 = vadd.f32 %v540, %v543
    %vm545 = vweird.f32 %v539
    %vm546 = vweird.f32 %v540
    %vm547 = vmor %vm545, %vm546
    %v548 = vsel %vm547, %v540, %v544
    %v549 = vand.u32 2147483647, %v539
    %vm550 = vcmp.eq.f32.partialorder %v549, 8.507059e+37
    %v551 = vand.u32 %v539, 2147483648
    %v552 = vor.u32 1.1754944e-38, %v551
    %v553 = vsel %vm550, %v552, %v548
    %v554 = vmul.f32 1.0, %v553
    %v555 = vadd.f32 %v533, %v134
    %557 = vrot.lane.b32.xlu0 %v555, 112
    %v558 = vpop.permute.xlu0 %557
    %v560 = vmul.f32 %v554, %v558
    %562 = vrot.lane.b32.xlu0 %v560, 16
    %v563 = vpop.permute.xlu0 %562
    %v565 = vadd.f32 %v509, %v563
    %v566 = vtanh.pop %v565
    %v567 = vsub.f32 1.0, %v554
    %569 = vrot.lane.b32.xlu0 %v566, 120
    %v570 = vpop.permute.xlu0 %569
    %v572 = vmul.f32 %v567, %v570
    %v573 = vmul.f32 %v554, %v504
    %v574 = vadd.f32 %v572, %v573
    %v575 = vrot.slane %v77, 7
    %v577 = vrot.slane %v80, 6
    %v579 = vsel %vm86, %v575, %v577
    %581 = vrot.lane.b32.xlu0 %v574, 120
    %v582 = vpop.permute.xlu0 %581
    %v583 = vsel %vm88, %v582, 0
    %585 = vmatpush.msra.mxu0 0.0
    %586 = vmatpush.msra.mxu0 0.0
    %587 = vmatpush.msra.mxu0 0.0
    %588 = vmatpush.msra.mxu0 0.0
    %589 = vmatpush.msra.mxu0 0.0
    %590 = vmatpush.msra.mxu0 0.0
    %591 = vmatpush.msra.mxu0 0.0
    %592 = vmatpush.msra.mxu0 0.0
    %593 = vmatpush.msra.mxu0 0.0
    %594 = vmatpush.msra.mxu0 0.0
    %595 = vmatpush.msra.mxu0 0.0
    %596 = vmatpush.msra.mxu0 0.0
    %597 = vmatpush.msra.mxu0 0.0
    %598 = vmatpush.msra.mxu0 0.0
    %599 = vmatpush.msra.mxu0 0.0
    %600 = vmatpush.msra.mxu0 %v82
    %601 = vmatmul.f32.gmra.mxu0 %v583
    %v602 = vpop.f32.mrf.mxu0
    %v603 = vadd.f32 0.0, %v602
    %604 = vdwg.mxu0
    %v605 = vadd.f32 %v579, %v603
    %v606 = vxor.u32 %v605, 2147483648
    %v607 = vmul.f32 %v606, 1.442695
    %v608 = vpow.pop %v607
    %v609 = vadd.f32 %v608, 1.0
    %v610 = vrcp.pop %v609
    %v611 = vmul.f32 %v609, %v610
    %v612 = vsub.f32 1.0, %v611
    %v613 = vmul.f32 %v610, %v612
    %v614 = vadd.f32 %v610, %v613
    %vm615 = vweird.f32 %v609
    %vm616 = vweird.f32 %v610
    %vm617 = vmor %vm615, %vm616
    %v618 = vsel %vm617, %v610, %v614
    %v619 = vand.u32 2147483647, %v609
    %vm620 = vcmp.eq.f32.partialorder %v619, 8.507059e+37
    %v621 = vand.u32 %v609, 2147483648
    %v622 = vor.u32 1.1754944e-38, %v621
    %v623 = vsel %vm620, %v622, %v618
    %v624 = vmul.f32 1.0, %v623
    %v625 = vadd.f32 %v603, %v134
    %627 = vrot.lane.b32.xlu0 %v625, 112
    %v628 = vpop.permute.xlu0 %627
    %v630 = vmul.f32 %v624, %v628
    %632 = vrot.lane.b32.xlu0 %v630, 16
    %v633 = vpop.permute.xlu0 %632
    %v635 = vadd.f32 %v579, %v633
    %v636 = vtanh.pop %v635
    %v637 = vsub.f32 1.0, %v624
    %639 = vrot.lane.b32.xlu0 %v636, 120
    %v640 = vpop.permute.xlu0 %639
    %v642 = vmul.f32 %v637, %v640
    %v643 = vmul.f32 %v624, %v574
    %v644 = vadd.f32 %v642, %v643
    %646 = vrot.lane.b32.xlu0 %v644, 120
    %v647 = vpop.permute.xlu0 %646
    %vm649 = vcmask 58368
    %650 = vst.msk [vmem:[#allocation6] sm:$0x3] %vm649, %v647
    %v651 = vrot.slane %v224, 7
    %v653 = vrot.slane %v294, 6
    %v655 = vrot.slane %v364, 5
    %v657 = vrot.slane %v434, 4
    %v659 = vrot.slane %v504, 3
    %v661 = vrot.slane %v574, 2
    %v663 = vrot.slane %v644, 1
    %v665 = vsel %vm86, %v155, %v651
    %v666 = vsel %vm55, %v665, %v653
    %vm667 = vcmask 1042432
    %v668 = vsel %vm667, %v666, %v655
    %vm669 = vcmask 1043456
    %v670 = vsel %vm669, %v668, %v657
    %vm671 = vcmask 1044480
    %v672 = vsel %vm671, %v670, %v659
    %vm673 = vcmask 1045504
    %v674 = vsel %vm673, %v672, %v661
    %vm675 = vcmask 1046528
    %v676 = vsel %vm675, %v674, %v663
    %v677 = vrot.slane %v155, 1
    %v679 = vrot.slane %v294, 7
    %v681 = vrot.slane %v364, 6
    %v683 = vrot.slane %v434, 5
    %v685 = vrot.slane %v504, 4
    %v687 = vrot.slane %v574, 3
    %v689 = vrot.slane %v644, 2
    %v691 = vsel %vm86, %v677, %v224
    %v692 = vsel %vm55, %v691, %v679
    %v693 = vsel %vm667, %v692, %v681
    %v694 = vsel %vm669, %v693, %v683
    %v695 = vsel %vm671, %v694, %v685
    %v696 = vsel %vm673, %v695, %v687
    %v697 = vsel %vm675, %v696, %v689
    %v698 = vld [vmem:[%s4] sm:$0xff]
    %v699 = vperm.slane %v41, 2
    %702 = vrot.lane.b32.xlu0 %v676, 120
    %v703 = vpop.permute.xlu0 %702
    %704 = vrot.lane.b32.xlu0 %v697, 120
    %v705 = vpop.permute.xlu0 %704
    %v706 = vsel %vm88, %v703, 0
    %v708 = vsel %vm88, %v705, 0
    %710 = vmatpush.msra.mxu0 0.0
    %711 = vmatpush.msra.mxu0 0.0
    %712 = vmatpush.msra.mxu0 0.0
    %713 = vmatpush.msra.mxu0 0.0
    %714 = vmatpush.msra.mxu0 0.0
    %715 = vmatpush.msra.mxu0 0.0
    %716 = vmatpush.msra.mxu0 0.0
    %717 = vmatpush.msra.mxu0 0.0
    %718 = vmatpush.msra.mxu0 0.0
    %719 = vmatpush.msra.mxu0 0.0
    %720 = vmatpush.msra.mxu0 0.0
    %721 = vmatpush.msra.mxu0 0.0
    %722 = vmatpush.msra.mxu0 0.0
    %723 = vmatpush.msra.mxu0 0.0
    %724 = vmatpush.msra.mxu0 0.0
    %725 = vmatpush.msra.mxu0 %v698
    %726 = vmatmul.f32.gmra.mxu0 %v706
    %v727 = vpop.f32.mrf.mxu0
    %v728 = vadd.f32 %v699, %v727
    %729 = vmatmul.f32.gmra.mxu0 %v708
    %v730 = vpop.f32.mrf.mxu0
    %v731 = vadd.f32 %v699, %v730
    %732 = vdwg.mxu0
    %v733 = vmax.f32 %v728, 0.0
    %v734 = vmax.f32 %v731, 0.0
    %v735 = vld [vmem:[#allocation2] sm:$0xff]
    %v736 = vperm.slane %v41, 3
    %v738 = vsel %vm88, %v733, 0
    %v741 = vsel %vm88, %v734, 0
    %743 = vmatpush.msra.mxu0 0.0
    %744 = vmatpush.msra.mxu0 0.0
    %745 = vmatpush.msra.mxu0 0.0
    %746 = vmatpush.msra.mxu0 0.0
    %747 = vmatpush.msra.mxu0 0.0
    %748 = vmatpush.msra.mxu0 0.0
    %749 = vmatpush.msra.mxu0 0.0
    %750 = vmatpush.msra.mxu0 0.0
    %751 = vmatpush.msra.mxu0 0.0
    %752 = vmatpush.msra.mxu0 0.0
    %753 = vmatpush.msra.mxu0 0.0
    %754 = vmatpush.msra.mxu0 0.0
    %755 = vmatpush.msra.mxu0 0.0
    %756 = vmatpush.msra.mxu0 0.0
    %757 = vmatpush.msra.mxu0 0.0
    %758 = vmatpush.msra.mxu0 %v735
    %759 = vmatmul.f32.gmra.mxu0 %v738
    %v760 = vpop.f32.mrf.mxu0
    %v761 = vadd.f32 %v736, %v760
    %762 = vmatmul.f32.gmra.mxu0 %v741
    %v763 = vpop.f32.mrf.mxu0
    %v764 = vadd.f32 %v736, %v763
    %765 = vdwg.mxu0
    %v766 = vsel %vm48, %v761, -inf
    %767 = vmax.xlane.f32.xlu0 %v766
    %v768 = vpop.xlane.xlu0 %767
    %v769 = vsel %vm48, %v764, -inf
    %770 = vmax.xlane.f32.xlu0 %v769
    %v771 = vpop.xlane.xlu0 %770
    %v772 = vsub.f32 %v761, %v768
    %v773 = vsub.f32 %v764, %v771
    %v774 = vmul.f32 %v772, 1.442695
    %v775 = vpow.pop %v774
    %v776 = vmul.f32 %v773, 1.442695
    %v777 = vpow.pop %v776
    %v778 = vsel %vm48, %v775, 0.0
    %779 = vadd.xlane.f32.xlu0 %v778
    %v780 = vpop.xlane.xlu0 %779
    %v781 = vsel %vm48, %v777, 0.0
    %782 = vadd.xlane.f32.xlu0 %v781
    %v783 = vpop.xlane.xlu0 %782
    %v784 = vlog2.pop %v780
    %v785 = vmul.f32 %v784, 0.6931472
    %v786 = vlog2.pop %v783
    %v787 = vmul.f32 %v786, 0.6931472
    %v788 = vadd.f32 %v785, %v768
    %v789 = vadd.f32 %v787, %v771
    %v790 = vsub.f32 %v761, %v788
    %v791 = vsub.f32 %v764, %v789
    %792 = vst.msk [vmem:[#allocation5] sm:$0xff] %vm48, %v790
    %793 = vst.msk [vmem:[#allocation5 + $0x8] sm:$0xff] %vm48, %v791
    // Predicated region
    $region30: #{network_forward.1} parent=1 // pred_check
      _
    $region31: #{network_forward.1} parent=1 // pred_check_branch
      %795 = sbr.rel (0) target = $region33
    $region32: #{network_forward.1} parent=1 // pred_region
      %797 = vsyncadd [#allocation4], 0
      %s798 = sshll.u32 [#allocation5], 4
      %s799 = int_to_ptr.vmem [resolvable:$true] %s798
      %s800 = sshll.u32 %s6, 4
      %s801 = int_to_ptr.hbm [resolvable:$true] %s800
      %806 = dma.vmem_to_hbm [thread:$0]  %s799, 256, %s801, [#allocation4], 128, 128, 8
    $region33: #{network_forward.1} parent=1 // pred_fallthru
      _
    // Predicated region
    $region34: #{network_forward.1} parent=1 // pred_check
      _
    $region35: #{network_forward.1} parent=1 // pred_check_branch
      %808 = sbr.rel (0) target = $region37
    $region36: #{network_forward.1} parent=1 // pred_region
      %810 = vsyncadd [#allocation7], 0
      %s812 = sshll.u32 [#allocation6], 4
      %s813 = int_to_ptr.vmem [resolvable:$true] %s812
      %s814 = sshll.u32 %s7, 4
      %s815 = int_to_ptr.hbm [resolvable:$true] %s814
      %817 = dma.vmem_to_hbm [thread:$0]  %s813, 32, %s815, [#allocation7]
    $region37: #{network_forward.1} parent=1 // pred_fallthru
      _
    // Predicated region
    $region38: #{network_forward.1} parent=1 // pred_check
      _
    $region39: #{network_forward.1} parent=1 // pred_check_branch
      %819 = sbr.rel (0) target = $region41
    $region40: #{network_forward.1} parent=1 // pred_region
      %821 = dma.done [#allocation4], 256
    $region41: #{network_forward.1} parent=1 // pred_fallthru
      _
    // Predicated region
    $region42: #{network_forward.1} parent=1 // pred_check
      _
    $region43: #{network_forward.1} parent=1 // pred_check_branch
      %823 = sbr.rel (0) target = $region45
    $region44: #{network_forward.1} parent=1 // pred_region
      %825 = dma.done [#allocation7], 32
    $region45: #{network_forward.1} parent=1 // pred_fallthru
      _
    %826 = vsyncpa [#allocation3], 1
    %827 = vsyncpa [#allocation4], 1
    %828 = vsyncpa [#allocation7], 1

</llo_original>
